<compile_context>
chip_gen: v7x
topology: tpu7x:2x2x1
jax: 0.10.0
libtpu: 0.0.40
codegen_flags: <defaults>
</compile_context>

<pallas_src>
import functools

import jax
import jax.numpy as jnp
from jax.experimental import pallas as pl
from jax.experimental.pallas import tpu as pltpu

HIDDEN = 512
LANE = 128
BATCH_TILE_CAP = 1024  # multiple of 256; fits comfortably with explicit vmem limit


def _round_up(x, m):
    return ((x + m - 1) // m) * m


def _cdiv(a, b):
    return (a + b - 1) // b


def _pick_batch_tile(batch):
    """Whole batch when small; otherwise >=2 grid steps (v7x dual-TC) with
    tiles that are multiples of 256 rows (full MXU M passes), capped at 1024."""
    if batch <= 256:
        return batch
    return min(_round_up(_cdiv(batch, 2), 256), BATCH_TILE_CAP)


def psi_kernel(x_ref, w1_ref, b1_ref, w2_ref, b2_ref, w3_ref, b3_ref, o_ref):
    # layer 1: Linear(num_inputs -> hidden) + ReLU   (bf16 operands, f32 accumulate)
    x = x_ref[...].astype(jnp.bfloat16)
    h1 = jnp.dot(x, w1_ref[...], preferred_element_type=jnp.float32) + b1_ref[...]
    h1 = jnp.maximum(h1, 0.0).astype(jnp.bfloat16)
    # layer 2: Linear(hidden -> hidden) + ReLU
    h2 = jnp.dot(h1, w2_ref[...], preferred_element_type=jnp.float32) + b2_ref[...]
    h2 = jnp.maximum(h2, 0.0).astype(jnp.bfloat16)
    # layer 3: Linear(hidden -> padded skill_dim), no activation; lane-dense [TB, 128k] store
    o_ref[...] = jnp.dot(h2, w3_ref[...], preferred_element_type=jnp.float32) + b3_ref[...]


def prepare_kernel_params(params):
    """Pad the final layer to a multiple of 128 lanes and cast weights to bf16."""
    w1, b1, w2, b2, w3, b3 = params
    skill_dim = w3.shape[1]
    n_pad = _round_up(skill_dim, LANE)
    w3p = jnp.zeros((w3.shape[0], n_pad), jnp.float32).at[:, :skill_dim].set(w3)
    b3p = jnp.zeros((1, n_pad), jnp.float32).at[:, :skill_dim].set(b3)
    kparams = (w1.astype(jnp.bfloat16), b1,
               w2.astype(jnp.bfloat16), b2,
               w3p.astype(jnp.bfloat16), b3p)
    return kparams, skill_dim


@functools.partial(jax.jit, static_argnames=("skill_dim", "keep_padded"))
def psi_forward(state, kernel_params, skill_dim, keep_padded=False):
    """state: [B, num_inputs] float32 -> [B, skill_dim] float32
    (or [B, 128-padded] float32 when keep_padded=True)."""
    w1, b1, w2, b2, w3, b3 = kernel_params
    B, num_inputs = state.shape
    hidden = w1.shape[1]
    n_pad = w3.shape[1]

    TB = _pick_batch_tile(B)
    grid = (_cdiv(B, TB),)

    flops = 2 * B * (num_inputs * hidden + hidden * hidden + hidden * n_pad)
    bytes_accessed = (state.size * state.dtype.itemsize
                      + sum(int(p.size) * p.dtype.itemsize for p in kernel_params)
                      + B * n_pad * 4)

    out_pad = pl.pallas_call(
        psi_kernel,
        out_shape=jax.ShapeDtypeStruct((B, n_pad), jnp.float32),
        grid_spec=pltpu.PrefetchScalarGridSpec(
            num_scalar_prefetch=0,
            grid=grid,
            in_specs=[
                pl.BlockSpec((TB, num_inputs), lambda i: (i, 0)),      # state tile
                pl.BlockSpec((num_inputs, hidden), lambda i: (0, 0)),  # w1 (resident)
                pl.BlockSpec((1, hidden), lambda i: (0, 0)),           # b1
                pl.BlockSpec((hidden, hidden), lambda i: (0, 0)),      # w2
                pl.BlockSpec((1, hidden), lambda i: (0, 0)),           # b2
                pl.BlockSpec((hidden, n_pad), lambda i: (0, 0)),       # w3 (padded)
                pl.BlockSpec((1, n_pad), lambda i: (0, 0)),            # b3 (padded)
            ],
            out_specs=pl.BlockSpec((TB, n_pad), lambda i: (i, 0)),
        ),
        compiler_params=pltpu.CompilerParams(
            dimension_semantics=("parallel",),
            vmem_limit_bytes=48 * 1024 * 1024,
        ),
        cost_estimate=pl.CostEstimate(
            flops=flops, transcendentals=0, bytes_accessed=bytes_accessed),
    )(state, w1, b1, w2, b2, w3, b3)

    if keep_padded:
        return out_pad
    # Static slice inside the same jit; fuses with downstream consumers instead
    # of being a standalone extra HBM pass over the output.
    return out_pad[:, :skill_dim]


def xavier_uniform(key, fan_in, fan_out):
    # torch.nn.init.xavier_uniform_ with gain=1: U(-a, a), a = sqrt(6/(fan_in+fan_out))
    a = (6.0 / (fan_in + fan_out)) ** 0.5
    return jax.random.uniform(key, (fan_in, fan_out), jnp.float32, minval=-a, maxval=a)


def init_psi_params(key, num_inputs, latent_dim, hidden_dim=HIDDEN):
    k1, k2, k3 = jax.random.split(key, 3)
    w1 = xavier_uniform(k1, num_inputs, hidden_dim)
    b1 = jnp.zeros((1, hidden_dim), jnp.float32)
    w2 = xavier_uniform(k2, hidden_dim, hidden_dim)
    b2 = jnp.zeros((1, hidden_dim), jnp.float32)
    w3 = xavier_uniform(k3, hidden_dim, latent_dim)
    b3 = jnp.zeros((1, latent_dim), jnp.float32)
    return (w1, b1, w2, b2, w3, b3)


def psi_forward_ref(state, params):
    # pure-f32 JAX reference matching the PyTorch module
    w1, b1, w2, b2, w3, b3 = params
    h1 = jnp.maximum(state @ w1 + b1, 0.0)
    h2 = jnp.maximum(h1 @ w2 + b2, 0.0)
    return h2 @ w3 + b3


# TODO(synk): only the forward pass is implemented; Adam optimizer state and the
# update_parameters training steps are out of scope for this kernel.

if __name__ == "__main__":
    num_inputs = 32   # observation (state) dimension
    latent_dim = 8    # skill_dim
    batch = 8

    key = jax.random.PRNGKey(0)
    k_params, k_state, k_big = jax.random.split(key, 3)
    params = init_psi_params(k_params, num_inputs, latent_dim)
    kernel_params, skill_dim = prepare_kernel_params(params)

    # Small-batch path (single grid step, TB == B).
    state = jax.random.normal(k_state, (batch, num_inputs), jnp.float32)
    out = psi_forward(state, kernel_params, skill_dim=skill_dim)
    out = jax.block_until_ready(out)
    ref = psi_forward_ref(state, params)
    assert out.shape == (batch, latent_dim)
    # bf16 weights/activations change results at the ~1e-3 absolute level; tolerance loosened
    assert jnp.allclose(out, ref, atol=2e-2, rtol=2e-2)

    # Multi-tile path: B=520 -> TB=512, grid=(2,) with a masked partial tile,
    # exercising the dual-TensorCore / pipelined-batch configuration.
    big_state = jax.random.normal(k_big, (520, num_inputs), jnp.float32)
    big_out = jax.block_until_ready(
        psi_forward(big_state, kernel_params, skill_dim=skill_dim))
    big_ref = psi_forward_ref(big_state, params)
    assert big_out.shape == (520, latent_dim)
    assert jnp.allclose(big_out, big_ref, atol=2e-2, rtol=2e-2)

    print("KERNEL_OK")
</pallas_src>

<mosaic_0001>
module attributes {stable_mosaic.version = 11 : i64} {
  func.func @psi_kernel(%arg0: i32, %arg1: memref<8x32xf32, #tpu.memory_space<vmem>>, %arg2: memref<32x512xbf16, #tpu.memory_space<vmem>>, %arg3: memref<1x512xf32, #tpu.memory_space<vmem>>, %arg4: memref<512x512xbf16, #tpu.memory_space<vmem>>, %arg5: memref<1x512xf32, #tpu.memory_space<vmem>>, %arg6: memref<512x128xbf16, #tpu.memory_space<vmem>>, %arg7: memref<1x128xf32, #tpu.memory_space<vmem>>, %arg8: memref<8x128xf32, #tpu.memory_space<vmem>>) attributes {dimension_semantics = [#tpu.dimension_semantics<parallel>], iteration_bounds = array<i64: 1>, scalar_prefetch = 0 : i64, scratch_operands = 0 : i64, tpu.core_type = #tpu.core_type<tc>, window_params = [{transform_indices = @transform_0, window_bounds = array<i64: 8, 32>}, {pipeline_mode = #tpu.pipeline_mode<synchronous>, transform_indices = @transform_1, window_bounds = array<i64: 32, 512>}, {pipeline_mode = #tpu.pipeline_mode<synchronous>, transform_indices = @transform_2, window_bounds = array<i64: 1, 512>}, {pipeline_mode = #tpu.pipeline_mode<synchronous>, transform_indices = @transform_3, window_bounds = array<i64: 512, 512>}, {pipeline_mode = #tpu.pipeline_mode<synchronous>, transform_indices = @transform_4, window_bounds = array<i64: 1, 512>}, {pipeline_mode = #tpu.pipeline_mode<synchronous>, transform_indices = @transform_5, window_bounds = array<i64: 512, 128>}, {pipeline_mode = #tpu.pipeline_mode<synchronous>, transform_indices = @transform_6, window_bounds = array<i64: 1, 128>}, {transform_indices = @transform_7, window_bounds = array<i64: 8, 128>}]} {
    %c0 = arith.constant 0 : index
    %c0_0 = arith.constant 0 : index
    %0 = vector.load %arg1[%c0, %c0_0] : memref<8x32xf32, #tpu.memory_space<vmem>>, vector<8x32xf32>
    %1 = arith.truncf %0 : vector<8x32xf32> to vector<8x32xbf16>
    %c0_1 = arith.constant 0 : index
    %c0_2 = arith.constant 0 : index
    %2 = vector.load %arg2[%c0_1, %c0_2] : memref<32x512xbf16, #tpu.memory_space<vmem>>, vector<32x512xbf16>
    %cst = arith.constant dense<0.000000e+00> : vector<8x512xf32>
    %3 = tpu.matmul %1, %2, %cst {dimension_numbers = #tpu.dot_dimension_numbers<[1], [0], [0], [1], [0, 0, 1, 1], [], []>} : vector<8x32xbf16>, vector<32x512xbf16>, vector<8x512xf32> -> vector<8x512xf32>
    %c0_3 = arith.constant 0 : index
    %c0_4 = arith.constant 0 : index
    %4 = vector.load %arg3[%c0_3, %c0_4] : memref<1x512xf32, #tpu.memory_space<vmem>>, vector<1x512xf32>
    %5 = vector.broadcast %4 : vector<1x512xf32> to vector<8x512xf32>
    %6 = arith.addf %3, %5 : vector<8x512xf32>
    %cst_5 = arith.constant 0.000000e+00 : f32
    %7 = vector.broadcast %cst_5 : f32 to vector<8x512xf32>
    %8 = arith.maximumf %6, %7 : vector<8x512xf32>
    %9 = arith.truncf %8 : vector<8x512xf32> to vector<8x512xbf16>
    %c0_6 = arith.constant 0 : index
    %c0_7 = arith.constant 0 : index
    %10 = vector.load %arg4[%c0_6, %c0_7] : memref<512x512xbf16, #tpu.memory_space<vmem>>, vector<512x512xbf16>
    %cst_8 = arith.constant dense<0.000000e+00> : vector<8x512xf32>
    %11 = tpu.matmul %9, %10, %cst_8 {dimension_numbers = #tpu.dot_dimension_numbers<[1], [0], [0], [1], [0, 0, 1, 1], [], []>} : vector<8x512xbf16>, vector<512x512xbf16>, vector<8x512xf32> -> vector<8x512xf32>
    %c0_9 = arith.constant 0 : index
    %c0_10 = arith.constant 0 : index
    %12 = vector.load %arg5[%c0_9, %c0_10] : memref<1x512xf32, #tpu.memory_space<vmem>>, vector<1x512xf32>
    %13 = vector.broadcast %12 : vector<1x512xf32> to vector<8x512xf32>
    %14 = arith.addf %11, %13 : vector<8x512xf32>
    %cst_11 = arith.constant 0.000000e+00 : f32
    %15 = vector.broadcast %cst_11 : f32 to vector<8x512xf32>
    %16 = arith.maximumf %14, %15 : vector<8x512xf32>
    %17 = arith.truncf %16 : vector<8x512xf32> to vector<8x512xbf16>
    %c0_12 = arith.constant 0 : index
    %c0_13 = arith.constant 0 : index
    %18 = vector.load %arg6[%c0_12, %c0_13] : memref<512x128xbf16, #tpu.memory_space<vmem>>, vector<512x128xbf16>
    %cst_14 = arith.constant dense<0.000000e+00> : vector<8x128xf32>
    %19 = tpu.matmul %17, %18, %cst_14 {dimension_numbers = #tpu.dot_dimension_numbers<[1], [0], [0], [1], [0, 0, 1, 1], [], []>} : vector<8x512xbf16>, vector<512x128xbf16>, vector<8x128xf32> -> vector<8x128xf32>
    %c0_15 = arith.constant 0 : index
    %c0_16 = arith.constant 0 : index
    %20 = vector.load %arg7[%c0_15, %c0_16] : memref<1x128xf32, #tpu.memory_space<vmem>>, vector<1x128xf32>
    %21 = vector.broadcast %20 : vector<1x128xf32> to vector<8x128xf32>
    %22 = arith.addf %19, %21 : vector<8x128xf32>
    %c0_17 = arith.constant 0 : index
    %c0_18 = arith.constant 0 : index
    %23 = vector.load %arg8[%c0_17, %c0_18] : memref<8x128xf32, #tpu.memory_space<vmem>>, vector<8x128xf32>
    tpu.vector_store %arg8[%c0_17, %c0_18], %22 {strides = array<i32>} : memref<8x128xf32, #tpu.memory_space<vmem>>, vector<8x128xf32>,
    return
  }
  func.func @transform_0(%arg0: i32) -> (i32, i32) {
    %c0_i32 = arith.constant 0 : i32
    %c0_i32_0 = arith.constant 0 : i32
    return %arg0, %c0_i32 : i32, i32
  }
  func.func @transform_1(%arg0: i32) -> (i32, i32) {
    %c0_i32 = arith.constant 0 : i32
    %c0_i32_0 = arith.constant 0 : i32
    %c0_i32_1 = arith.constant 0 : i32
    return %c0_i32, %c0_i32_0 : i32, i32
  }
  func.func @transform_2(%arg0: i32) -> (i32, i32) {
    %c0_i32 = arith.constant 0 : i32
    %c0_i32_0 = arith.constant 0 : i32
    %c0_i32_1 = arith.constant 0 : i32
    return %c0_i32, %c0_i32_0 : i32, i32
  }
  func.func @transform_3(%arg0: i32) -> (i32, i32) {
    %c0_i32 = arith.constant 0 : i32
    %c0_i32_0 = arith.constant 0 : i32
    %c0_i32_1 = arith.constant 0 : i32
    return %c0_i32, %c0_i32_0 : i32, i32
  }
  func.func @transform_4(%arg0: i32) -> (i32, i32) {
    %c0_i32 = arith.constant 0 : i32
    %c0_i32_0 = arith.constant 0 : i32
    %c0_i32_1 = arith.constant 0 : i32
    return %c0_i32, %c0_i32_0 : i32, i32
  }
  func.func @transform_5(%arg0: i32) -> (i32, i32) {
    %c0_i32 = arith.constant 0 : i32
    %c0_i32_0 = arith.constant 0 : i32
    %c0_i32_1 = arith.constant 0 : i32
    return %c0_i32, %c0_i32_0 : i32, i32
  }
  func.func @transform_6(%arg0: i32) -> (i32, i32) {
    %c0_i32 = arith.constant 0 : i32
    %c0_i32_0 = arith.constant 0 : i32
    %c0_i32_1 = arith.constant 0 : i32
    return %c0_i32, %c0_i32_0 : i32, i32
  }
  func.func @transform_7(%arg0: i32) -> (i32, i32) {
    %c0_i32 = arith.constant 0 : i32
    %c0_i32_0 = arith.constant 0 : i32
    return %arg0, %c0_i32 : i32, i32
  }
}

</mosaic_0001>

<llo_original>
// kernel: psi_forward.1
$region0: #{psi_forward.1}
  #allocation0 [shape = 'u32[]', space=smem, size = 0x4, offset = 0x4, fixed_abs, tag = 'smem constant byte address 0x4 - core index']
  #allocation1 [shape = 'u32[144,128]{1,0:T(1,128)}', space=vmem, size = 0x12000, scoped, tag = 'internal scratch']
  %s0 = inlined_call_operand.hbm [shape: f32[8,32], index: 0, kind: input, shape index: {}]
  %s1 = inlined_call_operand.hbm [shape: bf16[32,512], index: 1, kind: input, shape index: {}]
  %s2 = inlined_call_operand.vmem [shape: f32[1,512], index: 2, kind: input, shape index: {}]
  %s3 = inlined_call_operand.hbm [shape: bf16[512,512], index: 3, kind: input, shape index: {}]
  %s4 = inlined_call_operand.vmem [shape: f32[1,512], index: 4, kind: input, shape index: {}]
  %s5 = inlined_call_operand.hbm [shape: bf16[512,128], index: 5, kind: input, shape index: {}]
  %s6 = inlined_call_operand.vmem [shape: f32[1,128], index: 6, kind: input, shape index: {}]
  %s7 = inlined_call_operand.hbm [shape: f32[8,128], index: 7, kind: output, shape index: {}]
  %s8 = sld [smem:[#allocation0]]
  $region54: #{psi_forward.1} parent=0
    _
  %s10 = ssub.s32 1, %s8
  %s11 = scalar_select 0, %s10, %s8
  $region1: #{psi_forward.1} parent=0
    #allocation2 [shape = 'u8[4096]{0}', space=vmem, size = 0x1000, scoped, tag = 'input window, operand 0, single buffered']
    #allocation3 [shape = 's32[1]{0}', space=sflag, size = 0x4, scoped, tag = 'scoped memory for psi_forward.1']
    #allocation4 [shape = 's32[1]{0}', space=sflag, size = 0x4, scoped, tag = 'scoped memory for psi_forward.1']
    #allocation5 [shape = 'u8[32768]{0}', space=vmem, size = 0x8000, scoped, tag = 'input window, operand 1, single buffered']
    #allocation6 [shape = 's32[1]{0}', space=sflag, size = 0x4, scoped, tag = 'scoped memory for psi_forward.1']
    #allocation7 [shape = 'u8[524288]{0}', space=vmem, size = 0x80000, scoped, tag = 'input window, operand 3, single buffered']
    #allocation8 [shape = 'u8[131072]{0}', space=vmem, size = 0x20000, scoped, tag = 'input window, operand 5, single buffered']
    #allocation9 [shape = 's32[1]{0}', space=sflag, size = 0x4, scoped, tag = 'scoped memory for psi_forward.1']
    #allocation10 [shape = 'u8[4096]{0}', space=vmem, size = 0x1000, scoped, tag = 'output window, operand 0, single buffered']
    %12 = vsyncpa [#allocation3], 0
    %13 = vsyncpa [#allocation6], 0
    %14 = vsyncpa [#allocation9], 0
    %15 = vsyncpa [#allocation4], 0
    // Predicated region
    $region2: #{psi_forward.1} parent=1 // pred_check
      _
    $region3: #{psi_forward.1} parent=1 // pred_check_branch
      %17 = sbr.rel (0) target = $region5
    $region4: #{psi_forward.1} parent=1 // pred_region
      %s19 = ssub.s32 128, 128
      %20 = vsyncadd [#allocation3], %s19
      %s22 = sshll.u32 [#allocation2], 4
      %s23 = int_to_ptr.vmem [resolvable:$true] %s22
      %25 = dma.hbm_to_vmem [thread:$0]  %s0, 128, %s23, [#allocation3]
    $region5: #{psi_forward.1} parent=1 // pred_fallthru
      _
    // Predicated region
    $region6: #{psi_forward.1} parent=1 // pred_check
      _
    $region7: #{psi_forward.1} parent=1 // pred_check_branch
      %27 = sbr.rel (0) target = $region9
    $region8: #{psi_forward.1} parent=1 // pred_region
      %s29 = ssub.s32 1024, 1024
      %30 = vsyncadd [#allocation6], %s29
      %s31 = sshll.u32 [#allocation5], 4
      %s32 = int_to_ptr.vmem [resolvable:$true] %s31
      %37 = dma.hbm_to_vmem [thread:$0]  %s1, 1024, %s32, [#allocation6], 256, 256, 16
    $region9: #{psi_forward.1} parent=1 // pred_fallthru
      _
    // Predicated region
    $region10: #{psi_forward.1} parent=1 // pred_check
      _
    $region11: #{psi_forward.1} parent=1 // pred_check_branch
      %39 = sbr.rel (0) target = $region13
    $region12: #{psi_forward.1} parent=1 // pred_region
      _
    $region13: #{psi_forward.1} parent=1 // pred_fallthru
      _
    // Predicated region
    $region14: #{psi_forward.1} parent=1 // pred_check
      _
    $region15: #{psi_forward.1} parent=1 // pred_check_branch
      %41 = sbr.rel (0) target = $region17
    $region16: #{psi_forward.1} parent=1 // pred_region
      %s43 = ssub.s32 16384, 16384
      %44 = vsyncadd [#allocation6], %s43
      %s45 = sshll.u32 [#allocation7], 4
      %s46 = int_to_ptr.vmem [resolvable:$true] %s45
      %51 = dma.hbm_to_vmem [thread:$0]  %s3, 16384, %s46, [#allocation6], 256, 256, 16
    $region17: #{psi_forward.1} parent=1 // pred_fallthru
      _
    // Predicated region
    $region18: #{psi_forward.1} parent=1 // pred_check
      _
    $region19: #{psi_forward.1} parent=1 // pred_check_branch
      %53 = sbr.rel (0) target = $region21
    $region20: #{psi_forward.1} parent=1 // pred_region
      _
    $region21: #{psi_forward.1} parent=1 // pred_fallthru
      _
    // Predicated region
    $region22: #{psi_forward.1} parent=1 // pred_check
      _
    $region23: #{psi_forward.1} parent=1 // pred_check_branch
      %55 = sbr.rel (0) target = $region25
    $region24: #{psi_forward.1} parent=1 // pred_region
      %s57 = ssub.s32 4096, 4096
      %58 = vsyncadd [#allocation9], %s57
      %s59 = sshll.u32 [#allocation8], 4
      %s60 = int_to_ptr.vmem [resolvable:$true] %s59
      %65 = dma.hbm_to_vmem [thread:$0]  %s5, 4096, %s60, [#allocation9], 64, 64, 4
    $region25: #{psi_forward.1} parent=1 // pred_fallthru
      _
    // Predicated region
    $region26: #{psi_forward.1} parent=1 // pred_check
      _
    $region27: #{psi_forward.1} parent=1 // pred_check_branch
      %67 = sbr.rel (0) target = $region29
    $region28: #{psi_forward.1} parent=1 // pred_region
      _
    $region29: #{psi_forward.1} parent=1 // pred_fallthru
      _
    // Predicated region
    $region30: #{psi_forward.1} parent=1 // pred_check
      _
    $region31: #{psi_forward.1} parent=1 // pred_check_branch
      %69 = sbr.rel (0) target = $region33
    $region32: #{psi_forward.1} parent=1 // pred_region
      %70 = dma.done [#allocation3], 128
    $region33: #{psi_forward.1} parent=1 // pred_fallthru
      _
    // Predicated region
    $region34: #{psi_forward.1} parent=1 // pred_check
      _
    $region35: #{psi_forward.1} parent=1 // pred_check_branch
      %72 = sbr.rel (0) target = $region37
    $region36: #{psi_forward.1} parent=1 // pred_region
      %73 = dma.done [#allocation6], 1024
    $region37: #{psi_forward.1} parent=1 // pred_fallthru
      _
    // Predicated region
    $region38: #{psi_forward.1} parent=1 // pred_check
      _
    $region39: #{psi_forward.1} parent=1 // pred_check_branch
      %75 = sbr.rel (0) target = $region41
    $region40: #{psi_forward.1} parent=1 // pred_region
      %76 = dma.done [#allocation6], 16384
    $region41: #{psi_forward.1} parent=1 // pred_fallthru
      _
    // Predicated region
    $region42: #{psi_forward.1} parent=1 // pred_check
      _
    $region43: #{psi_forward.1} parent=1 // pred_check_branch
      %78 = sbr.rel (0) target = $region45
    $region44: #{psi_forward.1} parent=1 // pred_region
      %79 = dma.done [#allocation9], 4096
    $region45: #{psi_forward.1} parent=1 // pred_fallthru
      _
    %v81 = vld [vmem:[#allocation2] sm:$0xff]
    %v82 = vpack.c.bf16 %v81, %v81
    %v83 = vld [vmem:[#allocation5] sm:$0xff]
    %v84 = vld [vmem:[#allocation5 + $0x8] sm:$0xff]
    %v85 = vld [vmem:[#allocation5 + $0x10] sm:$0xff]
    %v86 = vld [vmem:[#allocation5 + $0x18] sm:$0xff]
    %v87 = vld [vmem:[#allocation5 + $0x20] sm:$0xff]
    %v88 = vld [vmem:[#allocation5 + $0x28] sm:$0xff]
    %v89 = vld [vmem:[#allocation5 + $0x30] sm:$0xff]
    %v90 = vld [vmem:[#allocation5 + $0x38] sm:$0xff]
    %v91 = vld [vmem:[%s2] sm:$0xf]
    %v93 = vlaneseq
    %v94 = vshrl.u32 %v93, 7
    %v95 = vsub.s32 0, %v94
    %v96 = vrot.slane %v91, %v95
    %v97 = vlaneseq
    %v98 = vshrl.u32 %v97, 7
    %v99 = vsub.s32 1, %v98
    %v100 = vrot.slane %v91, %v99
    %v101 = vlaneseq
    %v102 = vshrl.u32 %v101, 7
    %v103 = vsub.s32 2, %v102
    %v104 = vrot.slane %v91, %v103
    %v105 = vlaneseq
    %v106 = vshrl.u32 %v105, 7
    %v107 = vsub.s32 3, %v106
    %v108 = vrot.slane %v91, %v107
    %v121 = vunpack.c.l.b16 %v83
    %v122 = vunpack.c.h.b16 %v83
    %v123 = vunpack.c.l.b16 %v84
    %v124 = vunpack.c.h.b16 %v84
    %v125 = vunpack.c.l.b16 %v85
    %v126 = vunpack.c.h.b16 %v85
    %v127 = vunpack.c.l.b16 %v86
    %v128 = vunpack.c.h.b16 %v86
    %v129 = vunpack.c.l.b16 %v87
    %v130 = vunpack.c.h.b16 %v87
    %v131 = vunpack.c.l.b16 %v88
    %v132 = vunpack.c.h.b16 %v88
    %v133 = vunpack.c.l.b16 %v89
    %v134 = vunpack.c.h.b16 %v89
    %v135 = vunpack.c.l.b16 %v90
    %v136 = vunpack.c.h.b16 %v90
    %v137 = vpack.c.b16 %v125, %v121
    %v138 = vpack.c.b16 %v126, %v122
    %v139 = vpack.c.b16 %v127, %v123
    %v140 = vpack.c.b16 %v128, %v124
    %v141 = vpack.c.b16 %v133, %v129
    %v142 = vpack.c.b16 %v134, %v130
    %v143 = vpack.c.b16 %v135, %v131
    %v144 = vpack.c.b16 %v136, %v132
    %vm153 = vcmask 261120
    %v155 = vsel %vm153, %v82, 0
    %157 = vmatprep.subr.bf16.mxu0 %v138
    %158 = vmatpush1.bf16.msra.mxu0 %v137
    %159 = vmatprep.subr.bf16.mxu0 %v142
    %160 = vmatpush1.bf16.msra.mxu0 %v141
    %161 = vmatprep.subr.bf16.mxu0 0
    %162 = vmatpush1.bf16.msra.mxu0 0
    %163 = vmatprep.subr.bf16.mxu0 0
    %164 = vmatpush1.bf16.msra.mxu0 0
    %165 = vmatprep.subr.bf16.mxu0 0
    %166 = vmatpush1.bf16.msra.mxu0 0
    %167 = vmatprep.subr.bf16.mxu0 0
    %168 = vmatpush1.bf16.msra.mxu0 0
    %169 = vmatprep.subr.bf16.mxu0 0
    %170 = vmatpush1.bf16.msra.mxu0 0
    %171 = vmatprep.subr.bf16.mxu0 0
    %172 = vmatpush1.bf16.msra.mxu0 0
    %173 = vmatprep.subr.bf16.mxu0 0
    %174 = vmatpush1.bf16.msra.mxu0 0
    %175 = vmatprep.subr.bf16.mxu0 0
    %176 = vmatpush1.bf16.msra.mxu0 0
    %177 = vmatprep.subr.bf16.mxu0 0
    %178 = vmatpush1.bf16.msra.mxu0 0
    %179 = vmatprep.subr.bf16.mxu0 0
    %180 = vmatpush1.bf16.msra.mxu0 0
    %181 = vmatprep.subr.bf16.mxu0 0
    %182 = vmatpush1.bf16.msra.mxu0 0
    %183 = vmatprep.subr.bf16.mxu0 0
    %184 = vmatpush1.bf16.msra.mxu0 0
    %185 = vmatprep.subr.bf16.mxu0 0
    %186 = vmatpush1.bf16.msra.mxu0 0
    %187 = vmatprep.subr.bf16.mxu0 0
    %188 = vmatpush1.bf16.msra.mxu0 0
    %189 = vmatprep.mubr.bf16.mxu0 0
    %190 = vmatmul.mubr.bf16.gmra.mrb[0].mxu0 %v155
    %v191 = vpop.f32.mrb[0].mxu0
    %v192 = vadd.f32 %v96, %v191
    %v193 = vpop.f32.mrb[0].mxu0
    %v194 = vadd.f32 %v100, %v193
    %v195 = vpop.f32.mrb[0].mxu0
    %v196 = vpop.f32.mrb[0].mxu0
    %197 = vdwg.mxu0
    %198 = vmatprep.subr.bf16.mxu0 %v140
    %199 = vmatpush1.bf16.msra.mxu0 %v139
    %200 = vmatprep.subr.bf16.mxu0 %v144
    %201 = vmatpush1.bf16.msra.mxu0 %v143
    %202 = vmatprep.subr.bf16.mxu0 0
    %203 = vmatpush1.bf16.msra.mxu0 0
    %204 = vmatprep.subr.bf16.mxu0 0
    %205 = vmatpush1.bf16.msra.mxu0 0
    %206 = vmatprep.subr.bf16.mxu0 0
    %207 = vmatpush1.bf16.msra.mxu0 0
    %208 = vmatprep.subr.bf16.mxu0 0
    %209 = vmatpush1.bf16.msra.mxu0 0
    %210 = vmatprep.subr.bf16.mxu0 0
    %211 = vmatpush1.bf16.msra.mxu0 0
    %212 = vmatprep.subr.bf16.mxu0 0
    %213 = vmatpush1.bf16.msra.mxu0 0
    %214 = vmatprep.subr.bf16.mxu0 0
    %215 = vmatpush1.bf16.msra.mxu0 0
    %216 = vmatprep.subr.bf16.mxu0 0
    %217 = vmatpush1.bf16.msra.mxu0 0
    %218 = vmatprep.subr.bf16.mxu0 0
    %219 = vmatpush1.bf16.msra.mxu0 0
    %220 = vmatprep.subr.bf16.mxu0 0
    %221 = vmatpush1.bf16.msra.mxu0 0
    %222 = vmatprep.subr.bf16.mxu0 0
    %223 = vmatpush1.bf16.msra.mxu0 0
    %224 = vmatprep.subr.bf16.mxu0 0
    %225 = vmatpush1.bf16.msra.mxu0 0
    %226 = vmatprep.subr.bf16.mxu0 0
    %227 = vmatpush1.bf16.msra.mxu0 0
    %228 = vmatprep.subr.bf16.mxu0 0
    %229 = vmatpush1.bf16.msra.mxu0 0
    %230 = vmatprep.mubr.bf16.mxu0 0
    %231 = vmatmul.mubr.bf16.gmra.mrb[0].mxu0 %v155
    %v232 = vpop.f32.mrb[0].mxu0
    %v233 = vadd.f32 %v104, %v232
    %v234 = vpop.f32.mrb[0].mxu0
    %v235 = vadd.f32 %v108, %v234
    %v236 = vpop.f32.mrb[0].mxu0
    %v237 = vpop.f32.mrb[0].mxu0
    %238 = vdwg.mxu0
    %v239 = vmax.f32 %v192, 0.0
    %v240 = vmax.f32 %v194, 0.0
    %v241 = vmax.f32 %v233, 0.0
    %v242 = vmax.f32 %v235, 0.0
    %v243 = vpack.c.bf16 %v239, %v239
    %v244 = vpack.c.bf16 %v240, %v240
    %v245 = vpack.c.bf16 %v241, %v241
    %v246 = vpack.c.bf16 %v242, %v242
    %v247 = vld [vmem:[#allocation7] sm:$0xff]
    %v248 = vld [vmem:[#allocation7 + $0x8] sm:$0xff]
    %v249 = vld [vmem:[#allocation7 + $0x10] sm:$0xff]
    %v250 = vld [vmem:[#allocation7 + $0x18] sm:$0xff]
    %v251 = vld [vmem:[#allocation7 + $0x20] sm:$0xff]
    %v252 = vld [vmem:[#allocation7 + $0x28] sm:$0xff]
    %v253 = vld [vmem:[#allocation7 + $0x30] sm:$0xff]
    %v254 = vld [vmem:[#allocation7 + $0x38] sm:$0xff]
    %v255 = vld [vmem:[#allocation7 + $0x40] sm:$0xff]
    %v256 = vld [vmem:[#allocation7 + $0x48] sm:$0xff]
    %v257 = vld [vmem:[#allocation7 + $0x50] sm:$0xff]
    %v258 = vld [vmem:[#allocation7 + $0x58] sm:$0xff]
    %v259 = vld [vmem:[#allocation7 + $0x60] sm:$0xff]
    %v260 = vld [vmem:[#allocation7 + $0x68] sm:$0xff]
    %v261 = vld [vmem:[#allocation7 + $0x70] sm:$0xff]
    %v262 = vld [vmem:[#allocation7 + $0x78] sm:$0xff]
    %v263 = vld [vmem:[#allocation7 + $0x80] sm:$0xff]
    %v264 = vld [vmem:[#allocation7 + $0x88] sm:$0xff]
    %v265 = vld [vmem:[#allocation7 + $0x90] sm:$0xff]
    %v266 = vld [vmem:[#allocation7 + $0x98] sm:$0xff]
    %v267 = vld [vmem:[#allocation7 + $0xa0] sm:$0xff]
    %v268 = vld [vmem:[#allocation7 + $0xa8] sm:$0xff]
    %v269 = vld [vmem:[#allocation7 + $0xb0] sm:$0xff]
    %v270 = vld [vmem:[#allocation7 + $0xb8] sm:$0xff]
    %v271 = vld [vmem:[#allocation7 + $0xc0] sm:$0xff]
    %v272 = vld [vmem:[#allocation7 + $0xc8] sm:$0xff]
    %v273 = vld [vmem:[#allocation7 + $0xd0] sm:$0xff]
    %v274 = vld [vmem:[#allocation7 + $0xd8] sm:$0xff]
    %v275 = vld [vmem:[#allocation7 + $0xe0] sm:$0xff]
    %v276 = vld [vmem:[#allocation7 + $0xe8] sm:$0xff]
    %v277 = vld [vmem:[#allocation7 + $0xf0] sm:$0xff]
    %v278 = vld [vmem:[#allocation7 + $0xf8] sm:$0xff]
    %v279 = vld [vmem:[#allocation7 + $0x100] sm:$0xff]
    %v280 = vld [vmem:[#allocation7 + $0x108] sm:$0xff]
    %v281 = vld [vmem:[#allocation7 + $0x110] sm:$0xff]
    %v282 = vld [vmem:[#allocation7 + $0x118] sm:$0xff]
    %v283 = vld [vmem:[#allocation7 + $0x120] sm:$0xff]
    %v284 = vld [vmem:[#allocation7 + $0x128] sm:$0xff]
    %v285 = vld [vmem:[#allocation7 + $0x130] sm:$0xff]
    %v286 = vld [vmem:[#allocation7 + $0x138] sm:$0xff]
    %v287 = vld [vmem:[#allocation7 + $0x140] sm:$0xff]
    %v288 = vld [vmem:[#allocation7 + $0x148] sm:$0xff]
    %v289 = vld [vmem:[#allocation7 + $0x150] sm:$0xff]
    %v290 = vld [vmem:[#allocation7 + $0x158] sm:$0xff]
    %v291 = vld [vmem:[#allocation7 + $0x160] sm:$0xff]
    %v292 = vld [vmem:[#allocation7 + $0x168] sm:$0xff]
    %v293 = vld [vmem:[#allocation7 + $0x170] sm:$0xff]
    %v294 = vld [vmem:[#allocation7 + $0x178] sm:$0xff]
    %v295 = vld [vmem:[#allocation7 + $0x180] sm:$0xff]
    %v296 = vld [vmem:[#allocation7 + $0x188] sm:$0xff]
    %v297 = vld [vmem:[#allocation7 + $0x190] sm:$0xff]
    %v298 = vld [vmem:[#allocation7 + $0x198] sm:$0xff]
    %v299 = vld [vmem:[#allocation7 + $0x1a0] sm:$0xff]
    %v300 = vld [vmem:[#allocation7 + $0x1a8] sm:$0xff]
    %v301 = vld [vmem:[#allocation7 + $0x1b0] sm:$0xff]
    %v302 = vld [vmem:[#allocation7 + $0x1b8] sm:$0xff]
    %v303 = vld [vmem:[#allocation7 + $0x1c0] sm:$0xff]
    %v304 = vld [vmem:[#allocation7 + $0x1c8] sm:$0xff]
    %v305 = vld [vmem:[#allocation7 + $0x1d0] sm:$0xff]
    %v306 = vld [vmem:[#allocation7 + $0x1d8] sm:$0xff]
    %v307 = vld [vmem:[#allocation7 + $0x1e0] sm:$0xff]
    %v308 = vld [vmem:[#allocation7 + $0x1e8] sm:$0xff]
    %v309 = vld [vmem:[#allocation7 + $0x1f0] sm:$0xff]
    %v310 = vld [vmem:[#allocation7 + $0x1f8] sm:$0xff]
    %v311 = vld [vmem:[#allocation7 + $0x200] sm:$0xff]
    %v312 = vld [vmem:[#allocation7 + $0x208] sm:$0xff]
    %v313 = vld [vmem:[#allocation7 + $0x210] sm:$0xff]
    %v314 = vld [vmem:[#allocation7 + $0x218] sm:$0xff]
    %v315 = vld [vmem:[#allocation7 + $0x220] sm:$0xff]
    %v316 = vld [vmem:[#allocation7 + $0x228] sm:$0xff]
    %v317 = vld [vmem:[#allocation7 + $0x230] sm:$0xff]
    %v318 = vld [vmem:[#allocation7 + $0x238] sm:$0xff]
    %v319 = vld [vmem:[#allocation7 + $0x240] sm:$0xff]
    %v320 = vld [vmem:[#allocation7 + $0x248] sm:$0xff]
    %v321 = vld [vmem:[#allocation7 + $0x250] sm:$0xff]
    %v322 = vld [vmem:[#allocation7 + $0x258] sm:$0xff]
    %v323 = vld [vmem:[#allocation7 + $0x260] sm:$0xff]
    %v324 = vld [vmem:[#allocation7 + $0x268] sm:$0xff]
    %v325 = vld [vmem:[#allocation7 + $0x270] sm:$0xff]
    %v326 = vld [vmem:[#allocation7 + $0x278] sm:$0xff]
    %v327 = vld [vmem:[#allocation7 + $0x280] sm:$0xff]
    %v328 = vld [vmem:[#allocation7 + $0x288] sm:$0xff]
    %v329 = vld [vmem:[#allocation7 + $0x290] sm:$0xff]
    %v330 = vld [vmem:[#allocation7 + $0x298] sm:$0xff]
    %v331 = vld [vmem:[#allocation7 + $0x2a0] sm:$0xff]
    %v332 = vld [vmem:[#allocation7 + $0x2a8] sm:$0xff]
    %v333 = vld [vmem:[#allocation7 + $0x2b0] sm:$0xff]
    %v334 = vld [vmem:[#allocation7 + $0x2b8] sm:$0xff]
    %v335 = vld [vmem:[#allocation7 + $0x2c0] sm:$0xff]
    %v336 = vld [vmem:[#allocation7 + $0x2c8] sm:$0xff]
    %v337 = vld [vmem:[#allocation7 + $0x2d0] sm:$0xff]
    %v338 = vld [vmem:[#allocation7 + $0x2d8] sm:$0xff]
    %v339 = vld [vmem:[#allocation7 + $0x2e0] sm:$0xff]
    %v340 = vld [vmem:[#allocation7 + $0x2e8] sm:$0xff]
    %v341 = vld [vmem:[#allocation7 + $0x2f0] sm:$0xff]
    %v342 = vld [vmem:[#allocation7 + $0x2f8] sm:$0xff]
    %v343 = vld [vmem:[#allocation7 + $0x300] sm:$0xff]
    %v344 = vld [vmem:[#allocation7 + $0x308] sm:$0xff]
    %v345 = vld [vmem:[#allocation7 + $0x310] sm:$0xff]
    %v346 = vld [vmem:[#allocation7 + $0x318] sm:$0xff]
    %v347 = vld [vmem:[#allocation7 + $0x320] sm:$0xff]
    %v348 = vld [vmem:[#allocation7 + $0x328] sm:$0xff]
    %v349 = vld [vmem:[#allocation7 + $0x330] sm:$0xff]
    %v350 = vld [vmem:[#allocation7 + $0x338] sm:$0xff]
    %v351 = vld [vmem:[#allocation7 + $0x340] sm:$0xff]
    %v352 = vld [vmem:[#allocation7 + $0x348] sm:$0xff]
    %v353 = vld [vmem:[#allocation7 + $0x350] sm:$0xff]
    %v354 = vld [vmem:[#allocation7 + $0x358] sm:$0xff]
    %v355 = vld [vmem:[#allocation7 + $0x360] sm:$0xff]
    %v356 = vld [vmem:[#allocation7 + $0x368] sm:$0xff]
    %v357 = vld [vmem:[#allocation7 + $0x370] sm:$0xff]
    %v358 = vld [vmem:[#allocation7 + $0x378] sm:$0xff]
    %v359 = vld [vmem:[#allocation7 + $0x380] sm:$0xff]
    %v360 = vld [vmem:[#allocation7 + $0x388] sm:$0xff]
    %v361 = vld [vmem:[#allocation7 + $0x390] sm:$0xff]
    %v362 = vld [vmem:[#allocation7 + $0x398] sm:$0xff]
    %v363 = vld [vmem:[#allocation7 + $0x3a0] sm:$0xff]
    %v364 = vld [vmem:[#allocation7 + $0x3a8] sm:$0xff]
    %v365 = vld [vmem:[#allocation7 + $0x3b0] sm:$0xff]
    %v366 = vld [vmem:[#allocation7 + $0x3b8] sm:$0xff]
    %v367 = vld [vmem:[#allocation7 + $0x3c0] sm:$0xff]
    %v368 = vld [vmem:[#allocation7 + $0x3c8] sm:$0xff]
    %v369 = vld [vmem:[#allocation7 + $0x3d0] sm:$0xff]
    %v370 = vld [vmem:[#allocation7 + $0x3d8] sm:$0xff]
    %v371 = vld [vmem:[#allocation7 + $0x3e0] sm:$0xff]
    %v372 = vld [vmem:[#allocation7 + $0x3e8] sm:$0xff]
    %v373 = vld [vmem:[#allocation7 + $0x3f0] sm:$0xff]
    %v374 = vld [vmem:[#allocation7 + $0x3f8] sm:$0xff]
    %v375 = vld [vmem:[%s4] sm:$0xf]
    %v377 = vlaneseq
    %v378 = vshrl.u32 %v377, 7
    %v379 = vsub.s32 0, %v378
    %v380 = vrot.slane %v375, %v379
    %v381 = vlaneseq
    %v382 = vshrl.u32 %v381, 7
    %v383 = vsub.s32 1, %v382
    %v384 = vrot.slane %v375, %v383
    %v385 = vlaneseq
    %v386 = vshrl.u32 %v385, 7
    %v387 = vsub.s32 2, %v386
    %v388 = vrot.slane %v375, %v387
    %v389 = vlaneseq
    %v390 = vshrl.u32 %v389, 7
    %v391 = vsub.s32 3, %v390
    %v392 = vrot.slane %v375, %v391
    %v525 = vunpack.c.l.b16 %v247
    %v526 = vunpack.c.h.b16 %v247
    %v527 = vunpack.c.l.b16 %v248
    %v528 = vunpack.c.h.b16 %v248
    %v529 = vunpack.c.l.b16 %v249
    %v530 = vunpack.c.h.b16 %v249
    %v531 = vunpack.c.l.b16 %v250
    %v532 = vunpack.c.h.b16 %v250
    %v533 = vunpack.c.l.b16 %v251
    %v534 = vunpack.c.h.b16 %v251
    %v535 = vunpack.c.l.b16 %v252
    %v536 = vunpack.c.h.b16 %v252
    %v537 = vunpack.c.l.b16 %v253
    %v538 = vunpack.c.h.b16 %v253
    %v539 = vunpack.c.l.b16 %v254
    %v540 = vunpack.c.h.b16 %v254
    %v541 = vunpack.c.l.b16 %v255
    %v542 = vunpack.c.h.b16 %v255
    %v543 = vunpack.c.l.b16 %v256
    %v544 = vunpack.c.h.b16 %v256
    %v545 = vunpack.c.l.b16 %v257
    %v546 = vunpack.c.h.b16 %v257
    %v547 = vunpack.c.l.b16 %v258
    %v548 = vunpack.c.h.b16 %v258
    %v549 = vunpack.c.l.b16 %v259
    %v550 = vunpack.c.h.b16 %v259
    %v551 = vunpack.c.l.b16 %v260
    %v552 = vunpack.c.h.b16 %v260
    %v553 = vunpack.c.l.b16 %v261
    %v554 = vunpack.c.h.b16 %v261
    %v555 = vunpack.c.l.b16 %v262
    %v556 = vunpack.c.h.b16 %v262
    %v557 = vunpack.c.l.b16 %v263
    %v558 = vunpack.c.h.b16 %v263
    %v559 = vunpack.c.l.b16 %v264
    %v560 = vunpack.c.h.b16 %v264
    %v561 = vunpack.c.l.b16 %v265
    %v562 = vunpack.c.h.b16 %v265
    %v563 = vunpack.c.l.b16 %v266
    %v564 = vunpack.c.h.b16 %v266
    %v565 = vunpack.c.l.b16 %v267
    %v566 = vunpack.c.h.b16 %v267
    %v567 = vunpack.c.l.b16 %v268
    %v568 = vunpack.c.h.b16 %v268
    %v569 = vunpack.c.l.b16 %v269
    %v570 = vunpack.c.h.b16 %v269
    %v571 = vunpack.c.l.b16 %v270
    %v572 = vunpack.c.h.b16 %v270
    %v573 = vunpack.c.l.b16 %v271
    %v574 = vunpack.c.h.b16 %v271
    %v575 = vunpack.c.l.b16 %v272
    %v576 = vunpack.c.h.b16 %v272
    %v577 = vunpack.c.l.b16 %v273
    %v578 = vunpack.c.h.b16 %v273
    %v579 = vunpack.c.l.b16 %v274
    %v580 = vunpack.c.h.b16 %v274
    %v581 = vunpack.c.l.b16 %v275
    %v582 = vunpack.c.h.b16 %v275
    %v583 = vunpack.c.l.b16 %v276
    %v584 = vunpack.c.h.b16 %v276
    %v585 = vunpack.c.l.b16 %v277
    %v586 = vunpack.c.h.b16 %v277
    %v587 = vunpack.c.l.b16 %v278
    %v588 = vunpack.c.h.b16 %v278
    %v589 = vunpack.c.l.b16 %v279
    %v590 = vunpack.c.h.b16 %v279
    %v591 = vunpack.c.l.b16 %v280
    %v592 = vunpack.c.h.b16 %v280
    %v593 = vunpack.c.l.b16 %v281
    %v594 = vunpack.c.h.b16 %v281
    %v595 = vunpack.c.l.b16 %v282
    %v596 = vunpack.c.h.b16 %v282
    %v597 = vunpack.c.l.b16 %v283
    %v598 = vunpack.c.h.b16 %v283
    %v599 = vunpack.c.l.b16 %v284
    %v600 = vunpack.c.h.b16 %v284
    %v601 = vunpack.c.l.b16 %v285
    %v602 = vunpack.c.h.b16 %v285
    %v603 = vunpack.c.l.b16 %v286
    %v604 = vunpack.c.h.b16 %v286
    %v605 = vunpack.c.l.b16 %v287
    %v606 = vunpack.c.h.b16 %v287
    %v607 = vunpack.c.l.b16 %v288
    %v608 = vunpack.c.h.b16 %v288
    %v609 = vunpack.c.l.b16 %v289
    %v610 = vunpack.c.h.b16 %v289
    %v611 = vunpack.c.l.b16 %v290
    %v612 = vunpack.c.h.b16 %v290
    %v613 = vunpack.c.l.b16 %v291
    %v614 = vunpack.c.h.b16 %v291
    %v615 = vunpack.c.l.b16 %v292
    %v616 = vunpack.c.h.b16 %v292
    %v617 = vunpack.c.l.b16 %v293
    %v618 = vunpack.c.h.b16 %v293
    %v619 = vunpack.c.l.b16 %v294
    %v620 = vunpack.c.h.b16 %v294
    %v621 = vunpack.c.l.b16 %v295
    %v622 = vunpack.c.h.b16 %v295
    %v623 = vunpack.c.l.b16 %v296
    %v624 = vunpack.c.h.b16 %v296
    %v625 = vunpack.c.l.b16 %v297
    %v626 = vunpack.c.h.b16 %v297
    %v627 = vunpack.c.l.b16 %v298
    %v628 = vunpack.c.h.b16 %v298
    %v629 = vunpack.c.l.b16 %v299
    %v630 = vunpack.c.h.b16 %v299
    %v631 = vunpack.c.l.b16 %v300
    %v632 = vunpack.c.h.b16 %v300
    %v633 = vunpack.c.l.b16 %v301
    %v634 = vunpack.c.h.b16 %v301
    %v635 = vunpack.c.l.b16 %v302
    %v636 = vunpack.c.h.b16 %v302
    %v637 = vunpack.c.l.b16 %v303
    %v638 = vunpack.c.h.b16 %v303
    %v639 = vunpack.c.l.b16 %v304
    %v640 = vunpack.c.h.b16 %v304
    %v641 = vunpack.c.l.b16 %v305
    %v642 = vunpack.c.h.b16 %v305
    %v643 = vunpack.c.l.b16 %v306
    %v644 = vunpack.c.h.b16 %v306
    %v645 = vunpack.c.l.b16 %v307
    %v646 = vunpack.c.h.b16 %v307
    %v647 = vunpack.c.l.b16 %v308
    %v648 = vunpack.c.h.b16 %v308
    %v649 = vunpack.c.l.b16 %v309
    %v650 = vunpack.c.h.b16 %v309
    %v651 = vunpack.c.l.b16 %v310
    %v652 = vunpack.c.h.b16 %v310
    %v653 = vunpack.c.l.b16 %v311
    %v654 = vunpack.c.h.b16 %v311
    %v655 = vunpack.c.l.b16 %v312
    %v656 = vunpack.c.h.b16 %v312
    %v657 = vunpack.c.l.b16 %v313
    %v658 = vunpack.c.h.b16 %v313
    %v659 = vunpack.c.l.b16 %v314
    %v660 = vunpack.c.h.b16 %v314
    %v661 = vunpack.c.l.b16 %v315
    %v662 = vunpack.c.h.b16 %v315
    %v663 = vunpack.c.l.b16 %v316
    %v664 = vunpack.c.h.b16 %v316
    %v665 = vunpack.c.l.b16 %v317
    %v666 = vunpack.c.h.b16 %v317
    %v667 = vunpack.c.l.b16 %v318
    %v668 = vunpack.c.h.b16 %v318
    %v669 = vunpack.c.l.b16 %v319
    %v670 = vunpack.c.h.b16 %v319
    %v671 = vunpack.c.l.b16 %v320
    %v672 = vunpack.c.h.b16 %v320
    %v673 = vunpack.c.l.b16 %v321
    %v674 = vunpack.c.h.b16 %v321
    %v675 = vunpack.c.l.b16 %v322
    %v676 = vunpack.c.h.b16 %v322
    %v677 = vunpack.c.l.b16 %v323
    %v678 = vunpack.c.h.b16 %v323
    %v679 = vunpack.c.l.b16 %v324
    %v680 = vunpack.c.h.b16 %v324
    %v681 = vunpack.c.l.b16 %v325
    %v682 = vunpack.c.h.b16 %v325
    %v683 = vunpack.c.l.b16 %v326
    %v684 = vunpack.c.h.b16 %v326
    %v685 = vunpack.c.l.b16 %v327
    %v686 = vunpack.c.h.b16 %v327
    %v687 = vunpack.c.l.b16 %v328
    %v688 = vunpack.c.h.b16 %v328
    %v689 = vunpack.c.l.b16 %v329
    %v690 = vunpack.c.h.b16 %v329
    %v691 = vunpack.c.l.b16 %v330
    %v692 = vunpack.c.h.b16 %v330
    %v693 = vunpack.c.l.b16 %v331
    %v694 = vunpack.c.h.b16 %v331
    %v695 = vunpack.c.l.b16 %v332
    %v696 = vunpack.c.h.b16 %v332
    %v697 = vunpack.c.l.b16 %v333
    %v698 = vunpack.c.h.b16 %v333
    %v699 = vunpack.c.l.b16 %v334
    %v700 = vunpack.c.h.b16 %v334
    %v701 = vunpack.c.l.b16 %v335
    %v702 = vunpack.c.h.b16 %v335
    %v703 = vunpack.c.l.b16 %v336
    %v704 = vunpack.c.h.b16 %v336
    %v705 = vunpack.c.l.b16 %v337
    %v706 = vunpack.c.h.b16 %v337
    %v707 = vunpack.c.l.b16 %v338
    %v708 = vunpack.c.h.b16 %v338
    %v709 = vunpack.c.l.b16 %v339
    %v710 = vunpack.c.h.b16 %v339
    %v711 = vunpack.c.l.b16 %v340
    %v712 = vunpack.c.h.b16 %v340
    %v713 = vunpack.c.l.b16 %v341
    %v714 = vunpack.c.h.b16 %v341
    %v715 = vunpack.c.l.b16 %v342
    %v716 = vunpack.c.h.b16 %v342
    %v717 = vunpack.c.l.b16 %v343
    %v718 = vunpack.c.h.b16 %v343
    %v719 = vunpack.c.l.b16 %v344
    %v720 = vunpack.c.h.b16 %v344
    %v721 = vunpack.c.l.b16 %v345
    %v722 = vunpack.c.h.b16 %v345
    %v723 = vunpack.c.l.b16 %v346
    %v724 = vunpack.c.h.b16 %v346
    %v725 = vunpack.c.l.b16 %v347
    %v726 = vunpack.c.h.b16 %v347
    %v727 = vunpack.c.l.b16 %v348
    %v728 = vunpack.c.h.b16 %v348
    %v729 = vunpack.c.l.b16 %v349
    %v730 = vunpack.c.h.b16 %v349
    %v731 = vunpack.c.l.b16 %v350
    %v732 = vunpack.c.h.b16 %v350
    %v733 = vunpack.c.l.b16 %v351
    %v734 = vunpack.c.h.b16 %v351
    %v735 = vunpack.c.l.b16 %v352
    %v736 = vunpack.c.h.b16 %v352
    %v737 = vunpack.c.l.b16 %v353
    %v738 = vunpack.c.h.b16 %v353
    %v739 = vunpack.c.l.b16 %v354
    %v740 = vunpack.c.h.b16 %v354
    %v741 = vunpack.c.l.b16 %v355
    %v742 = vunpack.c.h.b16 %v355
    %v743 = vunpack.c.l.b16 %v356
    %v744 = vunpack.c.h.b16 %v356
    %v745 = vunpack.c.l.b16 %v357
    %v746 = vunpack.c.h.b16 %v357
    %v747 = vunpack.c.l.b16 %v358
    %v748 = vunpack.c.h.b16 %v358
    %v749 = vunpack.c.l.b16 %v359
    %v750 = vunpack.c.h.b16 %v359
    %v751 = vunpack.c.l.b16 %v360
    %v752 = vunpack.c.h.b16 %v360
    %v753 = vunpack.c.l.b16 %v361
    %v754 = vunpack.c.h.b16 %v361
    %v755 = vunpack.c.l.b16 %v362
    %v756 = vunpack.c.h.b16 %v362
    %v757 = vunpack.c.l.b16 %v363
    %v758 = vunpack.c.h.b16 %v363
    %v759 = vunpack.c.l.b16 %v364
    %v760 = vunpack.c.h.b16 %v364
    %v761 = vunpack.c.l.b16 %v365
    %v762 = vunpack.c.h.b16 %v365
    %v763 = vunpack.c.l.b16 %v366
    %v764 = vunpack.c.h.b16 %v366
    %v765 = vunpack.c.l.b16 %v367
    %v766 = vunpack.c.h.b16 %v367
    %v767 = vunpack.c.l.b16 %v368
    %v768 = vunpack.c.h.b16 %v368
    %v769 = vunpack.c.l.b16 %v369
    %v770 = vunpack.c.h.b16 %v369
    %v771 = vunpack.c.l.b16 %v370
    %v772 = vunpack.c.h.b16 %v370
    %v773 = vunpack.c.l.b16 %v371
    %v774 = vunpack.c.h.b16 %v371
    %v775 = vunpack.c.l.b16 %v372
    %v776 = vunpack.c.h.b16 %v372
    %v777 = vunpack.c.l.b16 %v373
    %v778 = vunpack.c.h.b16 %v373
    %v779 = vunpack.c.l.b16 %v374
    %v780 = vunpack.c.h.b16 %v374
    %v781 = vpack.c.b16 %v529, %v525
    %v782 = vpack.c.b16 %v530, %v526
    %v783 = vpack.c.b16 %v531, %v527
    %v784 = vpack.c.b16 %v532, %v528
    %v785 = vpack.c.b16 %v537, %v533
    %v786 = vpack.c.b16 %v538, %v534
    %v787 = vpack.c.b16 %v539, %v535
    %v788 = vpack.c.b16 %v540, %v536
    %v789 = vpack.c.b16 %v545, %v541
    %v790 = vpack.c.b16 %v546, %v542
    %v791 = vpack.c.b16 %v547, %v543
    %v792 = vpack.c.b16 %v548, %v544
    %v793 = vpack.c.b16 %v553, %v549
    %v794 = vpack.c.b16 %v554, %v550
    %v795 = vpack.c.b16 %v555, %v551
    %v796 = vpack.c.b16 %v556, %v552
    %v797 = vpack.c.b16 %v561, %v557
    %v798 = vpack.c.b16 %v562, %v558
    %v799 = vpack.c.b16 %v563, %v559
    %v800 = vpack.c.b16 %v564, %v560
    %v801 = vpack.c.b16 %v569, %v565
    %v802 = vpack.c.b16 %v570, %v566
    %v803 = vpack.c.b16 %v571, %v567
    %v804 = vpack.c.b16 %v572, %v568
    %v805 = vpack.c.b16 %v577, %v573
    %v806 = vpack.c.b16 %v578, %v574
    %v807 = vpack.c.b16 %v579, %v575
    %v808 = vpack.c.b16 %v580, %v576
    %v809 = vpack.c.b16 %v585, %v581
    %v810 = vpack.c.b16 %v586, %v582
    %v811 = vpack.c.b16 %v587, %v583
    %v812 = vpack.c.b16 %v588, %v584
    %v813 = vpack.c.b16 %v593, %v589
    %v814 = vpack.c.b16 %v594, %v590
    %v815 = vpack.c.b16 %v595, %v591
    %v816 = vpack.c.b16 %v596, %v592
    %v817 = vpack.c.b16 %v601, %v597
    %v818 = vpack.c.b16 %v602, %v598
    %v819 = vpack.c.b16 %v603, %v599
    %v820 = vpack.c.b16 %v604, %v600
    %v821 = vpack.c.b16 %v609, %v605
    %v822 = vpack.c.b16 %v610, %v606
    %v823 = vpack.c.b16 %v611, %v607
    %v824 = vpack.c.b16 %v612, %v608
    %v825 = vpack.c.b16 %v617, %v613
    %v826 = vpack.c.b16 %v618, %v614
    %v827 = vpack.c.b16 %v619, %v615
    %v828 = vpack.c.b16 %v620, %v616
    %v829 = vpack.c.b16 %v625, %v621
    %v830 = vpack.c.b16 %v626, %v622
    %v831 = vpack.c.b16 %v627, %v623
    %v832 = vpack.c.b16 %v628, %v624
    %v833 = vpack.c.b16 %v633, %v629
    %v834 = vpack.c.b16 %v634, %v630
    %v835 = vpack.c.b16 %v635, %v631
    %v836 = vpack.c.b16 %v636, %v632
    %v837 = vpack.c.b16 %v641, %v637
    %v838 = vpack.c.b16 %v642, %v638
    %v839 = vpack.c.b16 %v643, %v639
    %v840 = vpack.c.b16 %v644, %v640
    %v841 = vpack.c.b16 %v649, %v645
    %v842 = vpack.c.b16 %v650, %v646
    %v843 = vpack.c.b16 %v651, %v647
    %v844 = vpack.c.b16 %v652, %v648
    %v845 = vpack.c.b16 %v657, %v653
    %v846 = vpack.c.b16 %v658, %v654
    %v847 = vpack.c.b16 %v659, %v655
    %v848 = vpack.c.b16 %v660, %v656
    %v849 = vpack.c.b16 %v665, %v661
    %v850 = vpack.c.b16 %v666, %v662
    %v851 = vpack.c.b16 %v667, %v663
    %v852 = vpack.c.b16 %v668, %v664
    %v853 = vpack.c.b16 %v673, %v669
    %v854 = vpack.c.b16 %v674, %v670
    %v855 = vpack.c.b16 %v675, %v671
    %v856 = vpack.c.b16 %v676, %v672
    %v857 = vpack.c.b16 %v681, %v677
    %v858 = vpack.c.b16 %v682, %v678
    %v859 = vpack.c.b16 %v683, %v679
    %v860 = vpack.c.b16 %v684, %v680
    %v861 = vpack.c.b16 %v689, %v685
    %v862 = vpack.c.b16 %v690, %v686
    %v863 = vpack.c.b16 %v691, %v687
    %v864 = vpack.c.b16 %v692, %v688
    %v865 = vpack.c.b16 %v697, %v693
    %v866 = vpack.c.b16 %v698, %v694
    %v867 = vpack.c.b16 %v699, %v695
    %v868 = vpack.c.b16 %v700, %v696
    %v869 = vpack.c.b16 %v705, %v701
    %v870 = vpack.c.b16 %v706, %v702
    %v871 = vpack.c.b16 %v707, %v703
    %v872 = vpack.c.b16 %v708, %v704
    %v873 = vpack.c.b16 %v713, %v709
    %v874 = vpack.c.b16 %v714, %v710
    %v875 = vpack.c.b16 %v715, %v711
    %v876 = vpack.c.b16 %v716, %v712
    %v877 = vpack.c.b16 %v721, %v717
    %v878 = vpack.c.b16 %v722, %v718
    %v879 = vpack.c.b16 %v723, %v719
    %v880 = vpack.c.b16 %v724, %v720
    %v881 = vpack.c.b16 %v729, %v725
    %v882 = vpack.c.b16 %v730, %v726
    %v883 = vpack.c.b16 %v731, %v727
    %v884 = vpack.c.b16 %v732, %v728
    %v885 = vpack.c.b16 %v737, %v733
    %v886 = vpack.c.b16 %v738, %v734
    %v887 = vpack.c.b16 %v739, %v735
    %v888 = vpack.c.b16 %v740, %v736
    %v889 = vpack.c.b16 %v745, %v741
    %v890 = vpack.c.b16 %v746, %v742
    %v891 = vpack.c.b16 %v747, %v743
    %v892 = vpack.c.b16 %v748, %v744
    %v893 = vpack.c.b16 %v753, %v749
    %v894 = vpack.c.b16 %v754, %v750
    %v895 = vpack.c.b16 %v755, %v751
    %v896 = vpack.c.b16 %v756, %v752
    %v897 = vpack.c.b16 %v761, %v757
    %v898 = vpack.c.b16 %v762, %v758
    %v899 = vpack.c.b16 %v763, %v759
    %v900 = vpack.c.b16 %v764, %v760
    %v901 = vpack.c.b16 %v769, %v765
    %v902 = vpack.c.b16 %v770, %v766
    %v903 = vpack.c.b16 %v771, %v767
    %v904 = vpack.c.b16 %v772, %v768
    %v905 = vpack.c.b16 %v777, %v773
    %v906 = vpack.c.b16 %v778, %v774
    %v907 = vpack.c.b16 %v779, %v775
    %v908 = vpack.c.b16 %v780, %v776
    %1037 = vmatprep.subr.bf16.mxu0 %v782
    %1038 = vmatpush1.bf16.msra.mxu0 %v781
    %1039 = vmatprep.subr.bf16.mxu0 %v786
    %1040 = vmatpush1.bf16.msra.mxu0 %v785
    %1041 = vmatprep.subr.bf16.mxu0 %v790
    %1042 = vmatpush1.bf16.msra.mxu0 %v789
    %1043 = vmatprep.subr.bf16.mxu0 %v794
    %1044 = vmatpush1.bf16.msra.mxu0 %v793
    %1045 = vmatprep.subr.bf16.mxu0 %v798
    %1046 = vmatpush1.bf16.msra.mxu0 %v797
    %1047 = vmatprep.subr.bf16.mxu0 %v802
    %1048 = vmatpush1.bf16.msra.mxu0 %v801
    %1049 = vmatprep.subr.bf16.mxu0 %v806
    %1050 = vmatpush1.bf16.msra.mxu0 %v805
    %1051 = vmatprep.subr.bf16.mxu0 %v810
    %1052 = vmatpush1.bf16.msra.mxu0 %v809
    %1053 = vmatprep.subr.bf16.mxu0 %v814
    %1054 = vmatpush1.bf16.msra.mxu0 %v813
    %1055 = vmatprep.subr.bf16.mxu0 %v818
    %1056 = vmatpush1.bf16.msra.mxu0 %v817
    %1057 = vmatprep.subr.bf16.mxu0 %v822
    %1058 = vmatpush1.bf16.msra.mxu0 %v821
    %1059 = vmatprep.subr.bf16.mxu0 %v826
    %1060 = vmatpush1.bf16.msra.mxu0 %v825
    %1061 = vmatprep.subr.bf16.mxu0 %v830
    %1062 = vmatpush1.bf16.msra.mxu0 %v829
    %1063 = vmatprep.subr.bf16.mxu0 %v834
    %1064 = vmatpush1.bf16.msra.mxu0 %v833
    %1065 = vmatprep.subr.bf16.mxu0 %v838
    %1066 = vmatpush1.bf16.msra.mxu0 %v837
    %1067 = vmatprep.subr.bf16.mxu0 %v842
    %1068 = vmatpush1.bf16.msra.mxu0 %v841
    %1069 = vmatprep.mubr.bf16.mxu0 %v244
    %1070 = vmatmul.mubr.bf16.gmra.mrb[0].mxu0 %v243
    %v1071 = vpop.f32.mrb[0].mxu0
    %v1072 = vadd.f32 %v380, %v1071
    %v1073 = vpop.f32.mrb[0].mxu0
    %v1074 = vadd.f32 %v384, %v1073
    %v1075 = vpop.f32.mrb[0].mxu0
    %v1076 = vpop.f32.mrb[0].mxu0
    %1077 = vdwg.mxu0
    %1078 = vmatprep.subr.bf16.mxu0 %v846
    %1079 = vmatpush1.bf16.msra.mxu0 %v845
    %1080 = vmatprep.subr.bf16.mxu0 %v850
    %1081 = vmatpush1.bf16.msra.mxu0 %v849
    %1082 = vmatprep.subr.bf16.mxu0 %v854
    %1083 = vmatpush1.bf16.msra.mxu0 %v853
    %1084 = vmatprep.subr.bf16.mxu0 %v858
    %1085 = vmatpush1.bf16.msra.mxu0 %v857
    %1086 = vmatprep.subr.bf16.mxu0 %v862
    %1087 = vmatpush1.bf16.msra.mxu0 %v861
    %1088 = vmatprep.subr.bf16.mxu0 %v866
    %1089 = vmatpush1.bf16.msra.mxu0 %v865
    %1090 = vmatprep.subr.bf16.mxu0 %v870
    %1091 = vmatpush1.bf16.msra.mxu0 %v869
    %1092 = vmatprep.subr.bf16.mxu0 %v874
    %1093 = vmatpush1.bf16.msra.mxu0 %v873
    %1094 = vmatprep.subr.bf16.mxu0 %v878
    %1095 = vmatpush1.bf16.msra.mxu0 %v877
    %1096 = vmatprep.subr.bf16.mxu0 %v882
    %1097 = vmatpush1.bf16.msra.mxu0 %v881
    %1098 = vmatprep.subr.bf16.mxu0 %v886
    %1099 = vmatpush1.bf16.msra.mxu0 %v885
    %1100 = vmatprep.subr.bf16.mxu0 %v890
    %1101 = vmatpush1.bf16.msra.mxu0 %v889
    %1102 = vmatprep.subr.bf16.mxu0 %v894
    %1103 = vmatpush1.bf16.msra.mxu0 %v893
    %1104 = vmatprep.subr.bf16.mxu0 %v898
    %1105 = vmatpush1.bf16.msra.mxu0 %v897
    %1106 = vmatprep.subr.bf16.mxu0 %v902
    %1107 = vmatpush1.bf16.msra.mxu0 %v901
    %1108 = vmatprep.subr.bf16.mxu0 %v906
    %1109 = vmatpush1.bf16.msra.mxu0 %v905
    %1110 = vmatprep.mubr.bf16.mxu0 %v246
    %1111 = vmatmul.mubr.bf16.gmra.mrb[0].mxu0 %v245
    %v1112 = vpop.f32.mrb[0].mxu0
    %v1113 = vadd.f32 %v1072, %v1112
    %v1114 = vpop.f32.mrb[0].mxu0
    %v1115 = vadd.f32 %v1074, %v1114
    %v1116 = vpop.f32.mrb[0].mxu0
    %v1117 = vpop.f32.mrb[0].mxu0
    %1118 = vdwg.mxu0
    %1119 = vmatprep.subr.bf16.mxu0 %v784
    %1120 = vmatpush1.bf16.msra.mxu0 %v783
    %1121 = vmatprep.subr.bf16.mxu0 %v788
    %1122 = vmatpush1.bf16.msra.mxu0 %v787
    %1123 = vmatprep.subr.bf16.mxu0 %v792
    %1124 = vmatpush1.bf16.msra.mxu0 %v791
    %1125 = vmatprep.subr.bf16.mxu0 %v796
    %1126 = vmatpush1.bf16.msra.mxu0 %v795
    %1127 = vmatprep.subr.bf16.mxu0 %v800
    %1128 = vmatpush1.bf16.msra.mxu0 %v799
    %1129 = vmatprep.subr.bf16.mxu0 %v804
    %1130 = vmatpush1.bf16.msra.mxu0 %v803
    %1131 = vmatprep.subr.bf16.mxu0 %v808
    %1132 = vmatpush1.bf16.msra.mxu0 %v807
    %1133 = vmatprep.subr.bf16.mxu0 %v812
    %1134 = vmatpush1.bf16.msra.mxu0 %v811
    %1135 = vmatprep.subr.bf16.mxu0 %v816
    %1136 = vmatpush1.bf16.msra.mxu0 %v815
    %1137 = vmatprep.subr.bf16.mxu0 %v820
    %1138 = vmatpush1.bf16.msra.mxu0 %v819
    %1139 = vmatprep.subr.bf16.mxu0 %v824
    %1140 = vmatpush1.bf16.msra.mxu0 %v823
    %1141 = vmatprep.subr.bf16.mxu0 %v828
    %1142 = vmatpush1.bf16.msra.mxu0 %v827
    %1143 = vmatprep.subr.bf16.mxu0 %v832
    %1144 = vmatpush1.bf16.msra.mxu0 %v831
    %1145 = vmatprep.subr.bf16.mxu0 %v836
    %1146 = vmatpush1.bf16.msra.mxu0 %v835
    %1147 = vmatprep.subr.bf16.mxu0 %v840
    %1148 = vmatpush1.bf16.msra.mxu0 %v839
    %1149 = vmatprep.subr.bf16.mxu0 %v844
    %1150 = vmatpush1.bf16.msra.mxu0 %v843
    %1151 = vmatprep.mubr.bf16.mxu0 %v244
    %1152 = vmatmul.mubr.bf16.gmra.mrb[0].mxu0 %v243
    %v1153 = vpop.f32.mrb[0].mxu0
    %v1154 = vadd.f32 %v388, %v1153
    %v1155 = vpop.f32.mrb[0].mxu0
    %v1156 = vadd.f32 %v392, %v1155
    %v1157 = vpop.f32.mrb[0].mxu0
    %v1158 = vpop.f32.mrb[0].mxu0
    %1159 = vdwg.mxu0
    %1160 = vmatprep.subr.bf16.mxu0 %v848
    %1161 = vmatpush1.bf16.msra.mxu0 %v847
    %1162 = vmatprep.subr.bf16.mxu0 %v852
    %1163 = vmatpush1.bf16.msra.mxu0 %v851
    %1164 = vmatprep.subr.bf16.mxu0 %v856
    %1165 = vmatpush1.bf16.msra.mxu0 %v855
    %1166 = vmatprep.subr.bf16.mxu0 %v860
    %1167 = vmatpush1.bf16.msra.mxu0 %v859
    %1168 = vmatprep.subr.bf16.mxu0 %v864
    %1169 = vmatpush1.bf16.msra.mxu0 %v863
    %1170 = vmatprep.subr.bf16.mxu0 %v868
    %1171 = vmatpush1.bf16.msra.mxu0 %v867
    %1172 = vmatprep.subr.bf16.mxu0 %v872
    %1173 = vmatpush1.bf16.msra.mxu0 %v871
    %1174 = vmatprep.subr.bf16.mxu0 %v876
    %1175 = vmatpush1.bf16.msra.mxu0 %v875
    %1176 = vmatprep.subr.bf16.mxu0 %v880
    %1177 = vmatpush1.bf16.msra.mxu0 %v879
    %1178 = vmatprep.subr.bf16.mxu0 %v884
    %1179 = vmatpush1.bf16.msra.mxu0 %v883
    %1180 = vmatprep.subr.bf16.mxu0 %v888
    %1181 = vmatpush1.bf16.msra.mxu0 %v887
    %1182 = vmatprep.subr.bf16.mxu0 %v892
    %1183 = vmatpush1.bf16.msra.mxu0 %v891
    %1184 = vmatprep.subr.bf16.mxu0 %v896
    %1185 = vmatpush1.bf16.msra.mxu0 %v895
    %1186 = vmatprep.subr.bf16.mxu0 %v900
    %1187 = vmatpush1.bf16.msra.mxu0 %v899
    %1188 = vmatprep.subr.bf16.mxu0 %v904
    %1189 = vmatpush1.bf16.msra.mxu0 %v903
    %1190 = vmatprep.subr.bf16.mxu0 %v908
    %1191 = vmatpush1.bf16.msra.mxu0 %v907
    %1192 = vmatprep.mubr.bf16.mxu0 %v246
    %1193 = vmatmul.mubr.bf16.gmra.mrb[0].mxu0 %v245
    %v1194 = vpop.f32.mrb[0].mxu0
    %v1195 = vadd.f32 %v1154, %v1194
    %v1196 = vpop.f32.mrb[0].mxu0
    %v1197 = vadd.f32 %v1156, %v1196
    %v1198 = vpop.f32.mrb[0].mxu0
    %v1199 = vpop.f32.mrb[0].mxu0
    %1200 = vdwg.mxu0
    %v1201 = vmax.f32 %v1113, 0.0
    %v1202 = vmax.f32 %v1115, 0.0
    %v1203 = vmax.f32 %v1195, 0.0
    %v1204 = vmax.f32 %v1197, 0.0
    %v1205 = vpack.c.bf16 %v1201, %v1201
    %v1206 = vpack.c.bf16 %v1202, %v1202
    %v1207 = vpack.c.bf16 %v1203, %v1203
    %v1208 = vpack.c.bf16 %v1204, %v1204
    %v1209 = vld [vmem:[#allocation8] sm:$0xf]
    %v1210 = vld [vmem:[#allocation8 + $0x4] sm:$0xf]
    %v1211 = vld [vmem:[#allocation8 + $0x8] sm:$0xf]
    %v1212 = vld [vmem:[#allocation8 + $0xc] sm:$0xf]
    %v1213 = vld [vmem:[#allocation8 + $0x10] sm:$0xf]
    %v1214 = vld [vmem:[#allocation8 + $0x14] sm:$0xf]
    %v1215 = vld [vmem:[#allocation8 + $0x18] sm:$0xf]
    %v1216 = vld [vmem:[#allocation8 + $0x1c] sm:$0xf]
    %v1217 = vld [vmem:[#allocation8 + $0x20] sm:$0xf]
    %v1218 = vld [vmem:[#allocation8 + $0x24] sm:$0xf]
    %v1219 = vld [vmem:[#allocation8 + $0x28] sm:$0xf]
    %v1220 = vld [vmem:[#allocation8 + $0x2c] sm:$0xf]
    %v1221 = vld [vmem:[#allocation8 + $0x30] sm:$0xf]
    %v1222 = vld [vmem:[#allocation8 + $0x34] sm:$0xf]
    %v1223 = vld [vmem:[#allocation8 + $0x38] sm:$0xf]
    %v1224 = vld [vmem:[#allocation8 + $0x3c] sm:$0xf]
    %v1225 = vld [vmem:[#allocation8 + $0x40] sm:$0xf]
    %v1226 = vld [vmem:[#allocation8 + $0x44] sm:$0xf]
    %v1227 = vld [vmem:[#allocation8 + $0x48] sm:$0xf]
    %v1228 = vld [vmem:[#allocation8 + $0x4c] sm:$0xf]
    %v1229 = vld [vmem:[#allocation8 + $0x50] sm:$0xf]
    %v1230 = vld [vmem:[#allocation8 + $0x54] sm:$0xf]
    %v1231 = vld [vmem:[#allocation8 + $0x58] sm:$0xf]
    %v1232 = vld [vmem:[#allocation8 + $0x5c] sm:$0xf]
    %v1233 = vld [vmem:[#allocation8 + $0x60] sm:$0xf]
    %v1234 = vld [vmem:[#allocation8 + $0x64] sm:$0xf]
    %v1235 = vld [vmem:[#allocation8 + $0x68] sm:$0xf]
    %v1236 = vld [vmem:[#allocation8 + $0x6c] sm:$0xf]
    %v1237 = vld [vmem:[#allocation8 + $0x70] sm:$0xf]
    %v1238 = vld [vmem:[#allocation8 + $0x74] sm:$0xf]
    %v1239 = vld [vmem:[#allocation8 + $0x78] sm:$0xf]
    %v1240 = vld [vmem:[#allocation8 + $0x7c] sm:$0xf]
    %v1241 = vld [vmem:[#allocation8 + $0x80] sm:$0xf]
    %v1242 = vld [vmem:[#allocation8 + $0x84] sm:$0xf]
    %v1243 = vld [vmem:[#allocation8 + $0x88] sm:$0xf]
    %v1244 = vld [vmem:[#allocation8 + $0x8c] sm:$0xf]
    %v1245 = vld [vmem:[#allocation8 + $0x90] sm:$0xf]
    %v1246 = vld [vmem:[#allocation8 + $0x94] sm:$0xf]
    %v1247 = vld [vmem:[#allocation8 + $0x98] sm:$0xf]
    %v1248 = vld [vmem:[#allocation8 + $0x9c] sm:$0xf]
    %v1249 = vld [vmem:[#allocation8 + $0xa0] sm:$0xf]
    %v1250 = vld [vmem:[#allocation8 + $0xa4] sm:$0xf]
    %v1251 = vld [vmem:[#allocation8 + $0xa8] sm:$0xf]
    %v1252 = vld [vmem:[#allocation8 + $0xac] sm:$0xf]
    %v1253 = vld [vmem:[#allocation8 + $0xb0] sm:$0xf]
    %v1254 = vld [vmem:[#allocation8 + $0xb4] sm:$0xf]
    %v1255 = vld [vmem:[#allocation8 + $0xb8] sm:$0xf]
    %v1256 = vld [vmem:[#allocation8 + $0xbc] sm:$0xf]
    %v1257 = vld [vmem:[#allocation8 + $0xc0] sm:$0xf]
    %v1258 = vld [vmem:[#allocation8 + $0xc4] sm:$0xf]
    %v1259 = vld [vmem:[#allocation8 + $0xc8] sm:$0xf]
    %v1260 = vld [vmem:[#allocation8 + $0xcc] sm:$0xf]
    %v1261 = vld [vmem:[#allocation8 + $0xd0] sm:$0xf]
    %v1262 = vld [vmem:[#allocation8 + $0xd4] sm:$0xf]
    %v1263 = vld [vmem:[#allocation8 + $0xd8] sm:$0xf]
    %v1264 = vld [vmem:[#allocation8 + $0xdc] sm:$0xf]
    %v1265 = vld [vmem:[#allocation8 + $0xe0] sm:$0xf]
    %v1266 = vld [vmem:[#allocation8 + $0xe4] sm:$0xf]
    %v1267 = vld [vmem:[#allocation8 + $0xe8] sm:$0xf]
    %v1268 = vld [vmem:[#allocation8 + $0xec] sm:$0xf]
    %v1269 = vld [vmem:[#allocation8 + $0xf0] sm:$0xf]
    %v1270 = vld [vmem:[#allocation8 + $0xf4] sm:$0xf]
    %v1271 = vld [vmem:[#allocation8 + $0xf8] sm:$0xf]
    %v1272 = vld [vmem:[#allocation8 + $0xfc] sm:$0xf]
    %v1273 = vld [vmem:[%s6] sm:$0x1]
    %v1275 = vlaneseq
    %v1276 = vshrl.u32 %v1275, 7
    %v1277 = vsub.s32 0, %v1276
    %v1278 = vrot.slane %v1273, %v1277
    %v1344 = vunpack.c.l.b16 %v1209
    %v1345 = vunpack.c.l.b16 %v1210
    %v1346 = vunpack.c.l.b16 %v1211
    %v1347 = vunpack.c.l.b16 %v1212
    %v1348 = vunpack.c.l.b16 %v1213
    %v1349 = vunpack.c.l.b16 %v1214
    %v1350 = vunpack.c.l.b16 %v1215
    %v1351 = vunpack.c.l.b16 %v1216
    %v1352 = vunpack.c.l.b16 %v1217
    %v1353 = vunpack.c.l.b16 %v1218
    %v1354 = vunpack.c.l.b16 %v1219
    %v1355 = vunpack.c.l.b16 %v1220
    %v1356 = vunpack.c.l.b16 %v1221
    %v1357 = vunpack.c.l.b16 %v1222
    %v1358 = vunpack.c.l.b16 %v1223
    %v1359 = vunpack.c.l.b16 %v1224
    %v1360 = vunpack.c.l.b16 %v1225
    %v1361 = vunpack.c.l.b16 %v1226
    %v1362 = vunpack.c.l.b16 %v1227
    %v1363 = vunpack.c.l.b16 %v1228
    %v1364 = vunpack.c.l.b16 %v1229
    %v1365 = vunpack.c.l.b16 %v1230
    %v1366 = vunpack.c.l.b16 %v1231
    %v1367 = vunpack.c.l.b16 %v1232
    %v1368 = vunpack.c.l.b16 %v1233
    %v1369 = vunpack.c.l.b16 %v1234
    %v1370 = vunpack.c.l.b16 %v1235
    %v1371 = vunpack.c.l.b16 %v1236
    %v1372 = vunpack.c.l.b16 %v1237
    %v1373 = vunpack.c.l.b16 %v1238
    %v1374 = vunpack.c.l.b16 %v1239
    %v1375 = vunpack.c.l.b16 %v1240
    %v1376 = vunpack.c.l.b16 %v1241
    %v1377 = vunpack.c.l.b16 %v1242
    %v1378 = vunpack.c.l.b16 %v1243
    %v1379 = vunpack.c.l.b16 %v1244
    %v1380 = vunpack.c.l.b16 %v1245
    %v1381 = vunpack.c.l.b16 %v1246
    %v1382 = vunpack.c.l.b16 %v1247
    %v1383 = vunpack.c.l.b16 %v1248
    %v1384 = vunpack.c.l.b16 %v1249
    %v1385 = vunpack.c.l.b16 %v1250
    %v1386 = vunpack.c.l.b16 %v1251
    %v1387 = vunpack.c.l.b16 %v1252
    %v1388 = vunpack.c.l.b16 %v1253
    %v1389 = vunpack.c.l.b16 %v1254
    %v1390 = vunpack.c.l.b16 %v1255
    %v1391 = vunpack.c.l.b16 %v1256
    %v1392 = vunpack.c.l.b16 %v1257
    %v1393 = vunpack.c.l.b16 %v1258
    %v1394 = vunpack.c.l.b16 %v1259
    %v1395 = vunpack.c.l.b16 %v1260
    %v1396 = vunpack.c.l.b16 %v1261
    %v1397 = vunpack.c.l.b16 %v1262
    %v1398 = vunpack.c.l.b16 %v1263
    %v1399 = vunpack.c.l.b16 %v1264
    %v1400 = vunpack.c.l.b16 %v1265
    %v1401 = vunpack.c.l.b16 %v1266
    %v1402 = vunpack.c.l.b16 %v1267
    %v1403 = vunpack.c.l.b16 %v1268
    %v1404 = vunpack.c.l.b16 %v1269
    %v1405 = vunpack.c.l.b16 %v1270
    %v1406 = vunpack.c.l.b16 %v1271
    %v1407 = vunpack.c.l.b16 %v1272
    %v1408 = vpack.c.b16 %v1345, %v1344
    %v1409 = vpack.c.b16 %v1347, %v1346
    %v1410 = vpack.c.b16 %v1349, %v1348
    %v1411 = vpack.c.b16 %v1351, %v1350
    %v1412 = vpack.c.b16 %v1353, %v1352
    %v1413 = vpack.c.b16 %v1355, %v1354
    %v1414 = vpack.c.b16 %v1357, %v1356
    %v1415 = vpack.c.b16 %v1359, %v1358
    %v1416 = vpack.c.b16 %v1361, %v1360
    %v1417 = vpack.c.b16 %v1363, %v1362
    %v1418 = vpack.c.b16 %v1365, %v1364
    %v1419 = vpack.c.b16 %v1367, %v1366
    %v1420 = vpack.c.b16 %v1369, %v1368
    %v1421 = vpack.c.b16 %v1371, %v1370
    %v1422 = vpack.c.b16 %v1373, %v1372
    %v1423 = vpack.c.b16 %v1375, %v1374
    %v1424 = vpack.c.b16 %v1377, %v1376
    %v1425 = vpack.c.b16 %v1379, %v1378
    %v1426 = vpack.c.b16 %v1381, %v1380
    %v1427 = vpack.c.b16 %v1383, %v1382
    %v1428 = vpack.c.b16 %v1385, %v1384
    %v1429 = vpack.c.b16 %v1387, %v1386
    %v1430 = vpack.c.b16 %v1389, %v1388
    %v1431 = vpack.c.b16 %v1391, %v1390
    %v1432 = vpack.c.b16 %v1393, %v1392
    %v1433 = vpack.c.b16 %v1395, %v1394
    %v1434 = vpack.c.b16 %v1397, %v1396
    %v1435 = vpack.c.b16 %v1399, %v1398
    %v1436 = vpack.c.b16 %v1401, %v1400
    %v1437 = vpack.c.b16 %v1403, %v1402
    %v1438 = vpack.c.b16 %v1405, %v1404
    %v1439 = vpack.c.b16 %v1407, %v1406
    %1472 = vmatprep.subr.bf16.mxu0 0
    %1473 = vmatpush1.bf16.msra.mxu0 %v1408
    %1474 = vmatprep.subr.bf16.mxu0 0
    %1475 = vmatpush1.bf16.msra.mxu0 %v1409
    %1476 = vmatprep.subr.bf16.mxu0 0
    %1477 = vmatpush1.bf16.msra.mxu0 %v1410
    %1478 = vmatprep.subr.bf16.mxu0 0
    %1479 = vmatpush1.bf16.msra.mxu0 %v1411
    %1480 = vmatprep.subr.bf16.mxu0 0
    %1481 = vmatpush1.bf16.msra.mxu0 %v1412
    %1482 = vmatprep.subr.bf16.mxu0 0
    %1483 = vmatpush1.bf16.msra.mxu0 %v1413
    %1484 = vmatprep.subr.bf16.mxu0 0
    %1485 = vmatpush1.bf16.msra.mxu0 %v1414
    %1486 = vmatprep.subr.bf16.mxu0 0
    %1487 = vmatpush1.bf16.msra.mxu0 %v1415
    %1488 = vmatprep.subr.bf16.mxu0 0
    %1489 = vmatpush1.bf16.msra.mxu0 %v1416
    %1490 = vmatprep.subr.bf16.mxu0 0
    %1491 = vmatpush1.bf16.msra.mxu0 %v1417
    %1492 = vmatprep.subr.bf16.mxu0 0
    %1493 = vmatpush1.bf16.msra.mxu0 %v1418
    %1494 = vmatprep.subr.bf16.mxu0 0
    %1495 = vmatpush1.bf16.msra.mxu0 %v1419
    %1496 = vmatprep.subr.bf16.mxu0 0
    %1497 = vmatpush1.bf16.msra.mxu0 %v1420
    %1498 = vmatprep.subr.bf16.mxu0 0
    %1499 = vmatpush1.bf16.msra.mxu0 %v1421
    %1500 = vmatprep.subr.bf16.mxu0 0
    %1501 = vmatpush1.bf16.msra.mxu0 %v1422
    %1502 = vmatprep.subr.bf16.mxu0 0
    %1503 = vmatpush1.bf16.msra.mxu0 %v1423
    %1504 = vmatprep.mubr.bf16.mxu0 %v1206
    %1505 = vmatmul.mubr.bf16.gmra.mrb[0].mxu0 %v1205
    %v1506 = vpop.f32.mrb[0].mxu0
    %v1507 = vadd.f32 %v1278, %v1506
    %v1508 = vpop.f32.mrb[0].mxu0
    %v1509 = vpop.f32.mrb[0].mxu0
    %v1510 = vpop.f32.mrb[0].mxu0
    %1511 = vdwg.mxu0
    %1512 = vmatprep.subr.bf16.mxu0 0
    %1513 = vmatpush1.bf16.msra.mxu0 %v1424
    %1514 = vmatprep.subr.bf16.mxu0 0
    %1515 = vmatpush1.bf16.msra.mxu0 %v1425
    %1516 = vmatprep.subr.bf16.mxu0 0
    %1517 = vmatpush1.bf16.msra.mxu0 %v1426
    %1518 = vmatprep.subr.bf16.mxu0 0
    %1519 = vmatpush1.bf16.msra.mxu0 %v1427
    %1520 = vmatprep.subr.bf16.mxu0 0
    %1521 = vmatpush1.bf16.msra.mxu0 %v1428
    %1522 = vmatprep.subr.bf16.mxu0 0
    %1523 = vmatpush1.bf16.msra.mxu0 %v1429
    %1524 = vmatprep.subr.bf16.mxu0 0
    %1525 = vmatpush1.bf16.msra.mxu0 %v1430
    %1526 = vmatprep.subr.bf16.mxu0 0
    %1527 = vmatpush1.bf16.msra.mxu0 %v1431
    %1528 = vmatprep.subr.bf16.mxu0 0
    %1529 = vmatpush1.bf16.msra.mxu0 %v1432
    %1530 = vmatprep.subr.bf16.mxu0 0
    %1531 = vmatpush1.bf16.msra.mxu0 %v1433
    %1532 = vmatprep.subr.bf16.mxu0 0
    %1533 = vmatpush1.bf16.msra.mxu0 %v1434
    %1534 = vmatprep.subr.bf16.mxu0 0
    %1535 = vmatpush1.bf16.msra.mxu0 %v1435
    %1536 = vmatprep.subr.bf16.mxu0 0
    %1537 = vmatpush1.bf16.msra.mxu0 %v1436
    %1538 = vmatprep.subr.bf16.mxu0 0
    %1539 = vmatpush1.bf16.msra.mxu0 %v1437
    %1540 = vmatprep.subr.bf16.mxu0 0
    %1541 = vmatpush1.bf16.msra.mxu0 %v1438
    %1542 = vmatprep.subr.bf16.mxu0 0
    %1543 = vmatpush1.bf16.msra.mxu0 %v1439
    %1544 = vmatprep.mubr.bf16.mxu0 %v1208
    %1545 = vmatmul.mubr.bf16.gmra.mrb[0].mxu0 %v1207
    %v1546 = vpop.f32.mrb[0].mxu0
    %v1547 = vadd.f32 %v1507, %v1546
    %v1548 = vpop.f32.mrb[0].mxu0
    %v1549 = vpop.f32.mrb[0].mxu0
    %v1550 = vpop.f32.mrb[0].mxu0
    %1551 = vdwg.mxu0
    %1552 = vst [vmem:[#allocation10] sm:$0xff] %v1547
    // Predicated region
    $region46: #{psi_forward.1} parent=1 // pred_check
      _
    $region47: #{psi_forward.1} parent=1 // pred_check_branch
      %1554 = sbr.rel (0) target = $region49
    $region48: #{psi_forward.1} parent=1 // pred_region
      %s1556 = ssub.s32 128, 128
      %1557 = vsyncadd [#allocation4], %s1556
      %s1559 = sshll.u32 [#allocation10], 4
      %s1560 = int_to_ptr.vmem [resolvable:$true] %s1559
      %1562 = dma.vmem_to_hbm [thread:$0]  %s1560, 128, %s7, [#allocation4]
    $region49: #{psi_forward.1} parent=1 // pred_fallthru
      _
    // Predicated region
    $region50: #{psi_forward.1} parent=1 // pred_check
      _
    $region51: #{psi_forward.1} parent=1 // pred_check_branch
      %1564 = sbr.rel (0) target = $region53
    $region52: #{psi_forward.1} parent=1 // pred_region
      %1565 = dma.done [#allocation4], 128
    $region53: #{psi_forward.1} parent=1 // pred_fallthru
      _
    %1566 = vsyncpa [#allocation3], 1
    %1567 = vsyncpa [#allocation6], 1
    %1568 = vsyncpa [#allocation9], 1
    %1569 = vsyncpa [#allocation4], 1

</llo_original>
